<compile_context>
chip_gen: v5e
topology: v5e:2x2
jax: 0.10.0
libtpu: 0.0.40
codegen_flags: <defaults>
</compile_context>

<pallas_src>
import jax
import jax.numpy as jnp
from jax.experimental import pallas as pl
from jax.experimental.pallas import tpu as pltpu

NEG_INF = -1e30  # finite "minus infinity" used to mask padded class columns


def _round_up(x, m):
    return (x + m - 1) // m * m


def predictor_kernel(x_ref, w_ref, b_ref, o_ref):
    # x_ref: [tile_n, emb_dim] f32   w_ref: [emb_dim, ncls_pad] bf16 (pre-transposed)
    # b_ref: [1, ncls_pad] f32 (padded cols = NEG_INF)   o_ref: [tile_n, ncls_pad] f32
    x = x_ref[...].astype(jnp.bfloat16)                      # bf16 MXU operands
    logits = jnp.dot(x, w_ref[...],
                     preferred_element_type=jnp.float32) + b_ref[...]
    # Numerically stable log-softmax over the class (lane) axis, all in f32.
    m = jnp.max(logits, axis=-1, keepdims=True)
    s = logits - m
    lse = jnp.log(jnp.sum(jnp.exp(s), axis=-1, keepdims=True))
    o_ref[...] = (s - lse).astype(o_ref.dtype)


def predictor(x, params, *, tile_n=256):
    """x: [N, emb_dim] f32. params from init_params. Returns [N, ncls] f32."""
    n, emb_dim = x.shape
    w = params["w"]            # [emb_dim, ncls_pad] bf16
    b = params["b"]            # [1, ncls_pad] f32
    ncls = params["ncls"]
    ncls_pad = w.shape[1]

    tile_n = min(tile_n, _round_up(n, 8))    # v7x-safe VMEM footprint per step
    grid = (pl.cdiv(n, tile_n),)

    flops = 2 * n * emb_dim * ncls_pad
    bytes_accessed = (x.size * x.dtype.itemsize + w.size * 2
                      + b.size * 4 + n * ncls_pad * 4)

    out = pl.pallas_call(
        predictor_kernel,
        out_shape=jax.ShapeDtypeStruct((n, ncls_pad), jnp.float32),
        grid=grid,
        in_specs=[
            pl.BlockSpec((tile_n, emb_dim), lambda i: (i, 0)),      # row tile of x
            pl.BlockSpec((emb_dim, ncls_pad), lambda i: (0, 0)),    # full W^T (resident)
            pl.BlockSpec((1, ncls_pad), lambda i: (0, 0)),          # bias row
        ],
        out_specs=pl.BlockSpec((tile_n, ncls_pad), lambda i: (i, 0)),
        compiler_params=pltpu.CompilerParams(
            dimension_semantics=("parallel",)),
        cost_estimate=pl.CostEstimate(
            flops=flops,
            transcendentals=n * ncls_pad,
            bytes_accessed=bytes_accessed),
    )(x, w, b)
    return out[:, :ncls]


def init_params(key, emb_dim, ncls):
    """PyTorch-Linear-like init, prepacked in kernel layout."""
    ncls_pad = _round_up(ncls, 128)
    k1, k2 = jax.random.split(key)
    bound = 1.0 / jnp.sqrt(emb_dim)
    w = jax.random.uniform(k1, (ncls, emb_dim), jnp.float32, -bound, bound)
    b = jax.random.uniform(k2, (ncls,), jnp.float32, -bound, bound)
    # Pre-transpose to [emb, ncls]; zero-pad W columns, -inf-pad bias columns.
    w_t = jnp.zeros((emb_dim, ncls_pad), jnp.float32).at[:, :ncls].set(w.T)
    b_pad = jnp.full((1, ncls_pad), NEG_INF, jnp.float32).at[0, :ncls].set(b)
    return dict(w=w_t.astype(jnp.bfloat16), b=b_pad, ncls=ncls)


def predictor_ref(x, params):
    """Pure-JAX reference on the same (bf16-rounded) operands."""
    ncls = params["ncls"]
    w = params["w"].astype(jnp.float32)[:, :ncls]
    b = params["b"][0, :ncls]
    xb = x.astype(jnp.bfloat16).astype(jnp.float32)
    logits = xb @ w + b
    m = logits.max(axis=1, keepdims=True)
    s = logits - m
    return s - jnp.log(jnp.exp(s).sum(axis=1, keepdims=True))


if __name__ == "__main__":
    key = jax.random.PRNGKey(0)
    kx, kp = jax.random.split(key)

    N, EMB_DIM, NCLS = 8, 32, 10
    x = jax.random.normal(kx, (N, EMB_DIM), jnp.float32)
    params = init_params(kp, EMB_DIM, NCLS)

    out = predictor(x, params)
    out = jax.block_until_ready(out)

    ref = predictor_ref(x, params)
    assert out.shape == (N, NCLS)
    assert jnp.allclose(out, ref, atol=1e-4, rtol=1e-4), "mismatch vs reference"
    # log-probabilities must normalize per row
    assert jnp.allclose(jnp.exp(out).sum(axis=1), 1.0, atol=1e-4)

    print("KERNEL_OK")
</pallas_src>

<mosaic_0001>
module attributes {stable_mosaic.version = 11 : i64} {
  func.func @predictor_kernel(%arg0: i32, %arg1: memref<8x32xf32, #tpu.memory_space<vmem>>, %arg2: memref<32x128xbf16, #tpu.memory_space<vmem>>, %arg3: memref<1x128xf32, #tpu.memory_space<vmem>>, %arg4: memref<8x128xf32, #tpu.memory_space<vmem>>) attributes {dimension_semantics = [#tpu.dimension_semantics<parallel>], iteration_bounds = array<i64: 1>, scalar_prefetch = 0 : i64, scratch_operands = 0 : i64, tpu.core_type = #tpu.core_type<tc>, window_params = [{transform_indices = @transform_0, window_bounds = array<i64: 8, 32>}, {pipeline_mode = #tpu.pipeline_mode<synchronous>, transform_indices = @transform_1, window_bounds = array<i64: 32, 128>}, {pipeline_mode = #tpu.pipeline_mode<synchronous>, transform_indices = @transform_2, window_bounds = array<i64: 1, 128>}, {transform_indices = @transform_3, window_bounds = array<i64: 8, 128>}]} {
    %c0 = arith.constant 0 : index
    %c0_0 = arith.constant 0 : index
    %0 = vector.load %arg1[%c0, %c0_0] : memref<8x32xf32, #tpu.memory_space<vmem>>, vector<8x32xf32>
    %1 = arith.truncf %0 : vector<8x32xf32> to vector<8x32xbf16>
    %c0_1 = arith.constant 0 : index
    %c0_2 = arith.constant 0 : index
    %2 = vector.load %arg2[%c0_1, %c0_2] : memref<32x128xbf16, #tpu.memory_space<vmem>>, vector<32x128xbf16>
    %cst = arith.constant dense<0.000000e+00> : vector<8x128xf32>
    %3 = tpu.matmul %1, %2, %cst {dimension_numbers = #tpu.dot_dimension_numbers<[1], [0], [0], [1], [0, 0, 1, 1], [], []>} : vector<8x32xbf16>, vector<32x128xbf16>, vector<8x128xf32> -> vector<8x128xf32>
    %c0_3 = arith.constant 0 : index
    %c0_4 = arith.constant 0 : index
    %4 = vector.load %arg3[%c0_3, %c0_4] : memref<1x128xf32, #tpu.memory_space<vmem>>, vector<1x128xf32>
    %5 = vector.broadcast %4 : vector<1x128xf32> to vector<8x128xf32>
    %6 = arith.addf %3, %5 : vector<8x128xf32>
    %cst_5 = arith.constant dense<0xFF800000> : vector<8xf32>
    %7 = vector.multi_reduction <maximumf>, %6, %cst_5 [1] : vector<8x128xf32> to vector<8xf32>
    %8 = vector.shape_cast %7 : vector<8xf32> to vector<8x1xf32>
    %9 = vector.broadcast %8 : vector<8x1xf32> to vector<8x128xf32>
    %10 = arith.subf %6, %9 : vector<8x128xf32>
    %11 = math.exp %10 : vector<8x128xf32>
    %cst_6 = arith.constant dense<0.000000e+00> : vector<8xf32>
    %12 = vector.multi_reduction <add>, %11, %cst_6 [1] : vector<8x128xf32> to vector<8xf32>
    %13 = vector.shape_cast %12 : vector<8xf32> to vector<8x1xf32>
    %14 = math.log %13 : vector<8x1xf32>
    %15 = vector.broadcast %14 : vector<8x1xf32> to vector<8x128xf32>
    %16 = arith.subf %10, %15 : vector<8x128xf32>
    %c0_7 = arith.constant 0 : index
    %c0_8 = arith.constant 0 : index
    %17 = vector.load %arg4[%c0_7, %c0_8] : memref<8x128xf32, #tpu.memory_space<vmem>>, vector<8x128xf32>
    tpu.vector_store %arg4[%c0_7, %c0_8], %16 {strides = array<i32>} : memref<8x128xf32, #tpu.memory_space<vmem>>, vector<8x128xf32>,
    return
  }
  func.func @transform_0(%arg0: i32) -> (i32, i32) {
    %c0_i32 = arith.constant 0 : i32
    %c0_i32_0 = arith.constant 0 : i32
    return %arg0, %c0_i32 : i32, i32
  }
  func.func @transform_1(%arg0: i32) -> (i32, i32) {
    %c0_i32 = arith.constant 0 : i32
    %c0_i32_0 = arith.constant 0 : i32
    %c0_i32_1 = arith.constant 0 : i32
    return %c0_i32, %c0_i32_0 : i32, i32
  }
  func.func @transform_2(%arg0: i32) -> (i32, i32) {
    %c0_i32 = arith.constant 0 : i32
    %c0_i32_0 = arith.constant 0 : i32
    %c0_i32_1 = arith.constant 0 : i32
    return %c0_i32, %c0_i32_0 : i32, i32
  }
  func.func @transform_3(%arg0: i32) -> (i32, i32) {
    %c0_i32 = arith.constant 0 : i32
    %c0_i32_0 = arith.constant 0 : i32
    return %arg0, %c0_i32 : i32, i32
  }
}

</mosaic_0001>

<llo_original>
// kernel: tpu_custom_call.1
$region0: #{tpu_custom_call.1}
  #allocation0 [shape = 'u32[]', space=smem, size = 0x4, offset = 0x4, fixed_abs, tag = 'smem constant byte address 0x4 - core index']
  #allocation1 [shape = 'u32[72,128]{1,0:T(1,128)}', space=vmem, size = 0x9000, scoped, tag = 'internal scratch']
  %s0 = inlined_call_operand.hbm [shape: f32[8,32], index: 0, kind: input, shape index: {}]
  %s1 = inlined_call_operand.hbm [shape: bf16[32,128], index: 1, kind: input, shape index: {}]
  %s2 = inlined_call_operand.vmem [shape: f32[1,128], index: 2, kind: input, shape index: {}]
  %s3 = inlined_call_operand.hbm [shape: f32[8,128], index: 3, kind: output, shape index: {}]
  %s4 = sld [smem:[#allocation0]]
  $region30: #{tpu_custom_call.1} parent=0
    _
  %s6 = ssub.s32 1, %s4
  %s7 = scalar_select 0, %s6, %s4
  $region1: #{tpu_custom_call.1} parent=0
    #allocation2 [shape = 'u8[4096]{0}', space=vmem, size = 0x1000, scoped, tag = 'input window, operand 0, single buffered']
    #allocation3 [shape = 's32[1]{0}', space=sflag, size = 0x4, scoped, tag = 'scoped memory for tpu_custom_call.1']
    #allocation4 [shape = 's32[1]{0}', space=sflag, size = 0x4, scoped, tag = 'scoped memory for tpu_custom_call.1']
    #allocation5 [shape = 'u8[8192]{0}', space=vmem, size = 0x2000, scoped, tag = 'input window, operand 1, single buffered']
    #allocation6 [shape = 's32[1]{0}', space=sflag, size = 0x4, scoped, tag = 'scoped memory for tpu_custom_call.1']
    #allocation7 [shape = 'u8[4096]{0}', space=vmem, size = 0x1000, scoped, tag = 'output window, operand 0, single buffered']
    %8 = vsyncpa [#allocation3], 0
    %9 = vsyncpa [#allocation6], 0
    %10 = vsyncpa [#allocation4], 0
    // Predicated region
    $region2: #{tpu_custom_call.1} parent=1 // pred_check
      _
    $region3: #{tpu_custom_call.1} parent=1 // pred_check_branch
      %12 = sbr.rel (0) target = $region5
    $region4: #{tpu_custom_call.1} parent=1 // pred_region
      %14 = vsyncadd [#allocation3], 0
      %s16 = sshll.u32 %s0, 4
      %s17 = int_to_ptr.hbm [resolvable:$true] %s16
      %s18 = sshll.u32 [#allocation2], 4
      %s19 = int_to_ptr.vmem [resolvable:$true] %s18
      %21 = dma.hbm_to_vmem [thread:$0]  %s17, 128, %s19, [#allocation3]
    $region5: #{tpu_custom_call.1} parent=1 // pred_fallthru
      _
    // Predicated region
    $region6: #{tpu_custom_call.1} parent=1 // pred_check
      _
    $region7: #{tpu_custom_call.1} parent=1 // pred_check_branch
      %23 = sbr.rel (0) target = $region9
    $region8: #{tpu_custom_call.1} parent=1 // pred_region
      %25 = vsyncadd [#allocation6], 0
      %s26 = sshll.u32 %s1, 4
      %s27 = int_to_ptr.hbm [resolvable:$true] %s26
      %s28 = sshll.u32 [#allocation5], 4
      %s29 = int_to_ptr.vmem [resolvable:$true] %s28
      %34 = dma.hbm_to_vmem [thread:$0]  %s27, 256, %s29, [#allocation6], 64, 64, 4
    $region9: #{tpu_custom_call.1} parent=1 // pred_fallthru
      _
    // Predicated region
    $region10: #{tpu_custom_call.1} parent=1 // pred_check
      _
    $region11: #{tpu_custom_call.1} parent=1 // pred_check_branch
      %36 = sbr.rel (0) target = $region13
    $region12: #{tpu_custom_call.1} parent=1 // pred_region
      _
    $region13: #{tpu_custom_call.1} parent=1 // pred_fallthru
      _
    // Predicated region
    $region14: #{tpu_custom_call.1} parent=1 // pred_check
      _
    $region15: #{tpu_custom_call.1} parent=1 // pred_check_branch
      %38 = sbr.rel (0) target = $region17
    $region16: #{tpu_custom_call.1} parent=1 // pred_region
      %40 = dma.done [#allocation3], 128
    $region17: #{tpu_custom_call.1} parent=1 // pred_fallthru
      _
    // Predicated region
    $region18: #{tpu_custom_call.1} parent=1 // pred_check
      _
    $region19: #{tpu_custom_call.1} parent=1 // pred_check_branch
      %42 = sbr.rel (0) target = $region21
    $region20: #{tpu_custom_call.1} parent=1 // pred_region
      %44 = dma.done [#allocation6], 256
    $region21: #{tpu_custom_call.1} parent=1 // pred_fallthru
      _
    %v46 = vld [vmem:[#allocation2] sm:$0xff]
    %v47 = vpack.c.bf16 %v46, %v46
    %v48 = vld [vmem:[#allocation5] sm:$0xf]
    %v49 = vld [vmem:[#allocation5 + $0x4] sm:$0xf]
    %v50 = vld [vmem:[#allocation5 + $0x8] sm:$0xf]
    %v51 = vld [vmem:[#allocation5 + $0xc] sm:$0xf]
    %v52 = vld [vmem:[%s2] sm:$0x1]
    %v54 = vperm.slane %v52, 0
    %v60 = vunpack.c.l.b16 %v48
    %v61 = vunpack.c.l.b16 %v49
    %v62 = vunpack.c.l.b16 %v50
    %v63 = vunpack.c.l.b16 %v51
    %v64 = vpack.c.b16 %v61, %v60
    %v65 = vpack.c.b16 %v63, %v62
    %vm68 = vcmask 261120
    %v70 = vsel %vm68, %v47, 0
    %72 = vmatpush.bf16.msra.mxu0 0
    %73 = vmatpush.bf16.msra.mxu0 0
    %74 = vmatpush.bf16.msra.mxu0 0
    %75 = vmatpush.bf16.msra.mxu0 0
    %76 = vmatpush.bf16.msra.mxu0 0
    %77 = vmatpush.bf16.msra.mxu0 0
    %78 = vmatpush.bf16.msra.mxu0 %v65
    %79 = vmatpush.bf16.msra.mxu0 %v64
    %80 = vmatmul.bf16.gmra.mxu0 %v70
    %v81 = vpop.f32.mrf.mxu0
    %v82 = vadd.f32 %v54, %v81
    %v83 = vpop.f32.mrf.mxu0
    %84 = vdwg.mxu0
    %85 = vmax.xlane.f32.xlu0 %v82
    %v86 = vpop.xlane.xlu0 %85
    %v87 = vsub.f32 %v82, %v86
    %v88 = vmul.f32 %v87, 1.442695
    %v89 = vpow.pop %v88
    %90 = vadd.xlane.f32.xlu0 %v89
    %v91 = vpop.xlane.xlu0 %90
    %v92 = vlog2.pop %v91
    %v93 = vmul.f32 %v92, 0.6931472
    %v94 = vsub.f32 %v87, %v93
    %95 = vst [vmem:[#allocation7] sm:$0xff] %v94
    // Predicated region
    $region22: #{tpu_custom_call.1} parent=1 // pred_check
      _
    $region23: #{tpu_custom_call.1} parent=1 // pred_check_branch
      %97 = sbr.rel (0) target = $region25
    $region24: #{tpu_custom_call.1} parent=1 // pred_region
      %99 = vsyncadd [#allocation4], 0
      %s101 = sshll.u32 [#allocation7], 4
      %s102 = int_to_ptr.vmem [resolvable:$true] %s101
      %s103 = sshll.u32 %s3, 4
      %s104 = int_to_ptr.hbm [resolvable:$true] %s103
      %106 = dma.vmem_to_hbm [thread:$0]  %s102, 128, %s104, [#allocation4]
    $region25: #{tpu_custom_call.1} parent=1 // pred_fallthru
      _
    // Predicated region
    $region26: #{tpu_custom_call.1} parent=1 // pred_check
      _
    $region27: #{tpu_custom_call.1} parent=1 // pred_check_branch
      %108 = sbr.rel (0) target = $region29
    $region28: #{tpu_custom_call.1} parent=1 // pred_region
      %110 = dma.done [#allocation4], 128
    $region29: #{tpu_custom_call.1} parent=1 // pred_fallthru
      _
    %111 = vsyncpa [#allocation3], 1
    %112 = vsyncpa [#allocation6], 1
    %113 = vsyncpa [#allocation4], 1

</llo_original>
